<compile_context>
chip_gen: v5e
topology: v5e:2x2
jax: 0.10.0
libtpu: 0.0.40
codegen_flags: <defaults>
</compile_context>

<pallas_src>
import jax
import jax.numpy as jnp
from jax.experimental import pallas as pl
from jax.experimental.pallas import tpu as pltpu


def _copy_kernel(x_ref, o_ref):
    # Pure VMEM->VMEM copy of the current tile; lane-dense, no reshape.
    o_ref[...] = x_ref[...]


def _copy_2d_pallas(a2, *, max_block_bytes, vmem_limit_bytes):
    """Streaming HBM copy of a 2-D array using BlockSpec auto-pipelining."""
    M, N = a2.shape
    itemsize = a2.dtype.itemsize
    bytes_per_row = N * itemsize

    if bytes_per_row <= max_block_bytes:
        # Full-width row slabs: one grid axis over rows.
        tn = N
        rows_per_block = max(1, max_block_bytes // bytes_per_row)
        if rows_per_block >= M:
            tm = M
            # Split a single-block case across 2 grid steps so v7x's second
            # TensorCore gets work (requires tm to stay a multiple of 8).
            if M >= 16:
                half = -(-M // 2)
                cand = ((half + 7) // 8) * 8
                if cand < M:
                    tm = cand
        else:
            tm = max(8, (rows_per_block // 8) * 8)
        grid = (pl.cdiv(M, tm),)
        in_specs = [pl.BlockSpec((tm, tn), lambda i: (i, 0))]
        out_specs = pl.BlockSpec((tm, tn), lambda i: (i, 0))
        dims = ("parallel",)
    else:
        # Wide-N guard: column-tile in 128-lane multiples so a block never
        # exceeds the VMEM budget (previously tm=8 x full N could OOM VMEM).
        tn = min((((max_block_bytes // (8 * itemsize)) // 128) * 128), 2048)
        tn = max(tn, 128)
        rows_per_block = max(1, max_block_bytes // (tn * itemsize))
        if rows_per_block >= M:
            tm = M
        else:
            tm = max(8, (rows_per_block // 8) * 8)
        grid = (pl.cdiv(M, tm), pl.cdiv(N, tn))
        in_specs = [pl.BlockSpec((tm, tn), lambda i, j: (i, j))]
        out_specs = pl.BlockSpec((tm, tn), lambda i, j: (i, j))
        dims = ("parallel", "parallel")

    return pl.pallas_call(
        _copy_kernel,
        out_shape=jax.ShapeDtypeStruct((M, N), a2.dtype),
        grid_spec=pl.GridSpec(grid=grid, in_specs=in_specs, out_specs=out_specs),
        compiler_params=pltpu.CompilerParams(
            dimension_semantics=dims,
            vmem_limit_bytes=vmem_limit_bytes,
        ),
    )(a2)


def unsqueeze_neg3_pallas(a, *, max_block_bytes=8 * 1024 * 1024,
                          vmem_limit_bytes=48 * 1024 * 1024):
    """torch.unsqueeze(a, -3) for 2-D `a`: [M, N] -> [1, M, N]."""
    M, N = a.shape

    # If N is not lane-aligned, retile wrapper-side to a 128-multiple last dim
    # (data is contiguous row-major, so this is pure layout plumbing) to keep
    # the in-kernel stores on the unmasked lane-dense path.
    a2 = a
    lane_reshape = None
    if N % 128 != 0:
        total = M * N
        for width in (2048, 1024, 512, 256, 128):
            if total % width == 0:
                lane_reshape = (total // width, width)
                break
        if lane_reshape is not None:
            a2 = a.reshape(lane_reshape)

    out2d = _copy_2d_pallas(a2, max_block_bytes=max_block_bytes,
                            vmem_limit_bytes=vmem_limit_bytes)

    if lane_reshape is not None:
        out2d = out2d.reshape(M, N)
    # Leading size-1 dim added outside the kernel: free XLA reshape/bitcast.
    return out2d.reshape(1, M, N)


if __name__ == "__main__":
    key = jax.random.PRNGKey(0)

    # Small 2-D shape consistent with the module's [-1, -1] float32 input.
    M, N = 16, 256
    a = jax.random.normal(key, (M, N), dtype=jnp.float32)
    out = jax.block_until_ready(unsqueeze_neg3_pallas(a))
    ref = jnp.expand_dims(a, -3)
    assert out.shape == (1, M, N), out.shape
    assert out.dtype == a.dtype
    assert jnp.array_equal(out, ref)

    # Second small case exercising the non-128-multiple-N (lane-dense
    # retiling) path.
    M2, N2 = 16, 96
    b = jax.random.normal(jax.random.PRNGKey(0), (M2, N2), dtype=jnp.float32)
    out_b = jax.block_until_ready(unsqueeze_neg3_pallas(b))
    assert out_b.shape == (1, M2, N2), out_b.shape
    assert jnp.array_equal(out_b, jnp.expand_dims(b, -3))

    print("KERNEL_OK")
</pallas_src>

<mosaic_0001>
module attributes {stable_mosaic.version = 11 : i64} {
  func.func @_copy_kernel(%arg0: i32, %arg1: memref<8x256xf32, #tpu.memory_space<vmem>>, %arg2: memref<8x256xf32, #tpu.memory_space<vmem>>) attributes {dimension_semantics = [#tpu.dimension_semantics<parallel>], iteration_bounds = array<i64: 2>, scalar_prefetch = 0 : i64, scratch_operands = 0 : i64, tpu.core_type = #tpu.core_type<tc>, window_params = [{transform_indices = @transform_0, window_bounds = array<i64: 8, 256>}, {transform_indices = @transform_1, window_bounds = array<i64: 8, 256>}]} {
    %c0 = arith.constant 0 : index
    %c0_0 = arith.constant 0 : index
    %0 = vector.load %arg1[%c0, %c0_0] : memref<8x256xf32, #tpu.memory_space<vmem>>, vector<8x256xf32>
    %c0_1 = arith.constant 0 : index
    %c0_2 = arith.constant 0 : index
    %1 = vector.load %arg2[%c0_1, %c0_2] : memref<8x256xf32, #tpu.memory_space<vmem>>, vector<8x256xf32>
    tpu.vector_store %arg2[%c0_1, %c0_2], %0 {strides = array<i32>} : memref<8x256xf32, #tpu.memory_space<vmem>>, vector<8x256xf32>,
    return
  }
  func.func @transform_0(%arg0: i32) -> (i32, i32) {
    %c0_i32 = arith.constant 0 : i32
    %c0_i32_0 = arith.constant 0 : i32
    return %arg0, %c0_i32 : i32, i32
  }
  func.func @transform_1(%arg0: i32) -> (i32, i32) {
    %c0_i32 = arith.constant 0 : i32
    %c0_i32_0 = arith.constant 0 : i32
    return %arg0, %c0_i32 : i32, i32
  }
}

</mosaic_0001>

<llo_original>
// kernel: tpu_custom_call.1
$region0: #{tpu_custom_call.1}
  #allocation0 [shape = 'u32[]', space=smem, size = 0x4, offset = 0x4, fixed_abs, tag = 'smem constant byte address 0x4 - core index']
  #allocation1 [shape = 'u32[72,128]{1,0:T(1,128)}', space=vmem, size = 0x9000, scoped, tag = 'internal scratch']
  %s0 = inlined_call_operand.hbm [shape: f32[16,256], index: 0, kind: input, shape index: {}]
  %s1 = inlined_call_operand.hbm [shape: f32[16,256], index: 1, kind: output, shape index: {}]
  %s2 = sld [smem:[#allocation0]]
  $region41: #{tpu_custom_call.1} parent=0
    _
  %s4 = ssub.s32 1, %s2
  %s5 = scalar_select 0, %s4, %s2
  $region1: #{tpu_custom_call.1} parent=0
    #allocation2 [shape = 'u8[16384]{0}', space=vmem, size = 0x4000, scoped, tag = 'input window, operand 0']
    #allocation3 [shape = 's32[2]{0}', space=sflag, size = 0x8, scoped, tag = 'scoped memory for tpu_custom_call.1']
    #allocation4 [shape = 's32[2]{0}', space=sflag, size = 0x8, scoped, tag = 'scoped memory for tpu_custom_call.1']
    #allocation5 [shape = 'u8[16384]{0}', space=vmem, size = 0x4000, scoped, tag = 'output window, operand 0']
    %6 = vsyncpa [#allocation3], 0
    %s7 = scalar_lea.sflag [#allocation3], 1
    %8 = vsyncpa %s7, 0
    %9 = vsyncpa [#allocation4], 0
    %s10 = scalar_lea.sflag [#allocation4], 1
    %11 = vsyncpa %s10, 0
    loop: start=0, step=1, limit=4
    $region2: #{tpu_custom_call.1} parent=1 // loop_pre_header
      _
    $region3: #{tpu_custom_call.1} parent=1 // loop_header
      %s13 = sphi 0, %s17
      %p14 = scmp.ge.s32.totalorder %s13, 4
      %s23 = sphi 0, %s25
      %s26 = sphi 0, %s23
      %s27 = sphi 0, %s26
      %s43 = sphi 0, %s27
      %s49 = sphi 0, %s51
      %s52 = sphi 0, %s49
      %s53 = sphi 0, %s52
      %s69 = sphi 0, %s53
    $region4: #{tpu_custom_call.1} parent=1 // loop_header_branch
      %16 = sbr.rel (%p14) target = $region8
    $region5: #{tpu_custom_call.1} parent=1 // loop_body
      %s18 = ssub.s32 %s13, 1
      %s19 = ssub.s32 %s13, 2
      %s20 = sadd.s32 %s13, 1
      %s21 = ssub.s32 %s13, %s20
      %p22 = scmp.eq.s32.totalorder %s21, 0
      %s24 = sadd.s32 %s23, 1
      %s25 = scalar_select %p22, %s23, %s24
      %p28 = pneg %p22
      %p29 = scmp.eq.s32.totalorder %s13, 1
      %p30 = por %p28, %p29
      %p31 = scmp.ne.s32.totalorder %s23, %s26
      %p32 = scmp.eq.s32.totalorder %s13, 0
      %p33 = por %p31, %p32
      %p34 = scmp.ne.s32.totalorder %s23, %s26
      %p35 = scmp.eq.s32.totalorder %s18, 1
      %p36 = por %p34, %p35
      %p37 = scmp.ne.s32.totalorder %s26, %s27
      %p38 = scmp.eq.s32.totalorder %s18, 0
      %p39 = por %p37, %p38
      %p40 = scmp.ne.s32.totalorder %s26, %s27
      %p41 = scmp.eq.s32.totalorder %s19, 1
      %p42 = por %p40, %p41
      %p44 = scmp.ne.s32.totalorder %s27, %s43
      %p45 = scmp.eq.s32.totalorder %s19, 0
      %p46 = por %p44, %p45
      %s47 = ssub.s32 %s13, %s20
      %p48 = scmp.eq.s32.totalorder %s47, 0
      %s50 = sadd.s32 %s49, 1
      %s51 = scalar_select %p48, %s49, %s50
      %p54 = pneg %p48
      %p55 = scmp.eq.s32.totalorder %s13, 1
      %p56 = por %p54, %p55
      %p57 = scmp.ne.s32.totalorder %s49, %s52
      %p58 = scmp.eq.s32.totalorder %s13, 0
      %p59 = por %p57, %p58
      %p60 = scmp.ne.s32.totalorder %s49, %s52
      %p61 = scmp.eq.s32.totalorder %s18, 1
      %p62 = por %p60, %p61
      %p63 = scmp.ne.s32.totalorder %s52, %s53
      %p64 = scmp.eq.s32.totalorder %s18, 0
      %p65 = por %p63, %p64
      %p66 = scmp.ne.s32.totalorder %s52, %s53
      %p67 = scmp.eq.s32.totalorder %s19, 1
      %p68 = por %p66, %p67
      %p70 = scmp.ne.s32.totalorder %s53, %s69
      %p71 = scmp.eq.s32.totalorder %s19, 0
      %p72 = por %p70, %p71
      %p73 = scmp.le.s32.totalorder 1, %s13
      %p74 = scmp.lt.s32.totalorder %s13, 3
      %p75 = pnand %p73, %p74
      %p76 = pneg %p75
      // Predicated region
      $region9: #{tpu_custom_call.1} parent=5 // pred_check
        _
      $region10: #{tpu_custom_call.1} parent=5 // pred_check_branch
        %78 = sbr.rel (%p75) target = $region12
      $region11: #{tpu_custom_call.1} parent=5 // pred_region
        %s79 = ssub.s32 %s13, 1
      $region12: #{tpu_custom_call.1} parent=5 // pred_fallthru
        _
      %p80 = scmp.lt.s32.totalorder %s13, 2
      // Predicated region
      $region13: #{tpu_custom_call.1} parent=5 // pred_check
        %p81 = pneg %p80
      $region14: #{tpu_custom_call.1} parent=5 // pred_check_branch
        %83 = sbr.rel (%p81) target = $region16
      $region15: #{tpu_custom_call.1} parent=5 // pred_region
        // Predicated region
        $region17: #{tpu_custom_call.1} parent=15 // pred_check
          %p84 = pneg %p33
        $region18: #{tpu_custom_call.1} parent=15 // pred_check_branch
          %86 = sbr.rel (%p84) target = $region20
        $region19: #{tpu_custom_call.1} parent=15 // pred_region
          %s87 = sand.u32 %s23, 1
          %s88 = scalar_lea.sflag [#allocation3], %s87
          %s89 = sand.u32 %s23, 1
          %s90 = smul.addr %s89, 16
          %s91 = scalar_lea.vmem [#allocation2], %s90
          %93 = vsyncadd %s88, 0
          %s94 = smul.addr %s13, 2
          %s95 = smul.addr %s94, 8
          %s96 = scalar_lea.hbm %s0, %s95
          %s98 = sshll.u32 %s96, 4
          %s99 = int_to_ptr.hbm [resolvable:$true] %s98
          %s100 = sshll.u32 %s91, 4
          %s101 = int_to_ptr.vmem [resolvable:$true] %s100
          %103 = dma.hbm_to_vmem [thread:$0]  %s99, 256, %s101, %s88
        $region20: #{tpu_custom_call.1} parent=15 // pred_fallthru
          _
      $region16: #{tpu_custom_call.1} parent=5 // pred_fallthru
        _
      %p104 = scmp.le.s32.totalorder 1, %s13
      %p105 = scmp.lt.s32.totalorder %s13, 3
      %p106 = pnand %p104, %p105
      %p107 = pneg %p106
      // Predicated region
      $region21: #{tpu_custom_call.1} parent=5 // pred_check
        _
      $region22: #{tpu_custom_call.1} parent=5 // pred_check_branch
        %109 = sbr.rel (%p106) target = $region24
      $region23: #{tpu_custom_call.1} parent=5 // pred_region
        %s110 = ssub.s32 %s13, 1
        %s111 = sand.u32 %s26, 1
        %s112 = scalar_lea.sflag [#allocation3], %s111
        %s113 = sand.u32 %s26, 1
        %s114 = smul.addr %s113, 16
        %s115 = scalar_lea.vmem [#allocation2], %s114
        // Predicated region
        $region25: #{tpu_custom_call.1} parent=23 // pred_check
          %p116 = pneg %p39
        $region26: #{tpu_custom_call.1} parent=23 // pred_check_branch
          %118 = sbr.rel (%p116) target = $region28
        $region27: #{tpu_custom_call.1} parent=23 // pred_region
          %120 = dma.done %s112, 256
        $region28: #{tpu_custom_call.1} parent=23 // pred_fallthru
          _
        %s121 = sand.u32 %s26, 1
        %s122 = scalar_lea.sflag [#allocation3], %s121
        %s123 = sand.u32 %s26, 1
        %s124 = smul.addr %s123, 16
        %s125 = scalar_lea.vmem [#allocation2], %s124
        %p126 = pneg %p39
        %p127 = pneg %p36
        %p128 = pneg %p65
        %p129 = pneg %p62
        %s130 = sand.u32 %s52, 1
        %s131 = scalar_lea.sflag [#allocation4], %s130
        %s132 = sand.u32 %s52, 1
        %s133 = smul.addr %s132, 16
        %s134 = scalar_lea.vmem [#allocation5], %s133
        %v135 = vld [vmem:[%s115] sm:$0xff]
        %v136 = vld [vmem:[%s115 + $0x8] sm:$0xff]
        %137 = vst [vmem:[%s134] sm:$0xff] %v135
        %138 = vst [vmem:[%s134 + $0x8] sm:$0xff] %v136
        %s139 = sand.u32 %s52, 1
        %s140 = scalar_lea.sflag [#allocation4], %s139
        %s141 = sand.u32 %s52, 1
        %s142 = smul.addr %s141, 16
        %s143 = scalar_lea.vmem [#allocation5], %s142
        // Predicated region
        $region29: #{tpu_custom_call.1} parent=23 // pred_check
          %p144 = pneg %p62
        $region30: #{tpu_custom_call.1} parent=23 // pred_check_branch
          %146 = sbr.rel (%p144) target = $region32
        $region31: #{tpu_custom_call.1} parent=23 // pred_region
          %148 = vsyncadd %s140, 0
          %s149 = smul.addr %s18, 2
          %s150 = smul.addr %s149, 8
          %s151 = scalar_lea.hbm %s1, %s150
          %s153 = sshll.u32 %s143, 4
          %s154 = int_to_ptr.vmem [resolvable:$true] %s153
          %s155 = sshll.u32 %s151, 4
          %s156 = int_to_ptr.hbm [resolvable:$true] %s155
          %158 = dma.vmem_to_hbm [thread:$0]  %s154, 256, %s156, %s140
        $region32: #{tpu_custom_call.1} parent=23 // pred_fallthru
          _
      $region24: #{tpu_custom_call.1} parent=5 // pred_fallthru
        _
      %p159 = scmp.le.s32.totalorder 2, %s13
      // Predicated region
      $region33: #{tpu_custom_call.1} parent=5 // pred_check
        %p160 = pneg %p159
      $region34: #{tpu_custom_call.1} parent=5 // pred_check_branch
        %162 = sbr.rel (%p160) target = $region36
      $region35: #{tpu_custom_call.1} parent=5 // pred_region
        %s163 = ssub.s32 %s13, 2
        // Predicated region
        $region37: #{tpu_custom_call.1} parent=35 // pred_check
          %p164 = pneg %p68
        $region38: #{tpu_custom_call.1} parent=35 // pred_check_branch
          %166 = sbr.rel (%p164) target = $region40
        $region39: #{tpu_custom_call.1} parent=35 // pred_region
          %s167 = sand.u32 %s53, 1
          %s168 = scalar_lea.sflag [#allocation4], %s167
          %s169 = sand.u32 %s53, 1
          %s170 = smul.addr %s169, 16
          %s171 = scalar_lea.vmem [#allocation5], %s170
          %173 = dma.done %s168, 256
        $region40: #{tpu_custom_call.1} parent=35 // pred_fallthru
          _
      $region36: #{tpu_custom_call.1} parent=5 // pred_fallthru
        _
    $region6: #{tpu_custom_call.1} parent=1 // loop_footer
      %s17 = sadd.s32 1, %s13
    $region7: #{tpu_custom_call.1} parent=1 // loop_footer_branch
      %12 = sbr.rel target = $region3
    $region8: #{tpu_custom_call.1} parent=1 // loop_exit
      _
    %174 = vsyncpa [#allocation3], 1
    %s175 = scalar_lea.sflag [#allocation3], 1
    %176 = vsyncpa %s175, 1
    %177 = vsyncpa [#allocation4], 1
    %s178 = scalar_lea.sflag [#allocation4], 1
    %179 = vsyncpa %s178, 1

</llo_original>
